<compile_context>
chip_gen: v7x
topology: tpu7x:2x2x1
jax: 0.10.0
libtpu: 0.0.40
codegen_flags: <defaults>
</compile_context>

<pallas_src>
import functools

import numpy as np
import jax
import jax.numpy as jnp
from jax.experimental import pallas as pl
from jax.experimental.pallas import tpu as pltpu


_LANE = 128


def _round_up(x, m):
    return ((x + m - 1) // m) * m


def _vmem_budget_bytes():
    """Generation-aware scoped-VMEM budget (physical capacity - headroom)."""
    try:
        cap = int(pltpu.get_tpu_info().vmem_capacity_bytes)
    except Exception:
        cap = 64 * 2**20  # conservative default (v7x per-TC VMEM)
    return max(16 * 2**20, cap - 16 * 2**20)


# ----------------------------------------------------------------------------
# Kernels
# ----------------------------------------------------------------------------
def _gcn3_resident_kernel(a_ref, x_ref, w_ref, b_ref, o_ref, *, n_layers):
    """Fully fused path: bf16 A_hat stays resident in VMEM for all layers."""
    a = a_ref[...]                         # (n_p, n_p) bf16, loaded once
    h = x_ref[...]                         # (n_p, F)  f32
    for l in range(n_layers):
        # Feature transform in f32 (small), aggregation in bf16 on the MXU
        # with f32 accumulation.
        hw = jnp.dot(h, w_ref[l], preferred_element_type=jnp.float32)
        y = jnp.dot(a, hw.astype(jnp.bfloat16),
                    preferred_element_type=jnp.float32) + b_ref[l]
        h = jnp.maximum(y, 0.0) if l < n_layers - 1 else y
    o_ref[...] = h.astype(o_ref.dtype)


def _gcn3_tiled_kernel(a_ref, x_ref, w_ref, b_ref, o_ref, h_ref, hw_ref, *, tm):
    """Streamed fallback: grid=(layer, row_tile).

    A_hat is streamed by (tm, n_p) bf16 row tiles (re-read once per layer);
    H@W is computed once per layer into VMEM scratch; the intermediate
    activations live entirely in VMEM scratch (no HBM round-trip).
    """
    l = pl.program_id(0)
    i = pl.program_id(1)
    last_layer = pl.num_programs(0) - 1

    # At the first row tile of each layer, materialize HW = H_prev @ W_l once.
    @pl.when(i == 0)
    def _():
        w = w_ref[0]

        @pl.when(l == 0)
        def _():
            hw_ref[...] = jnp.dot(
                x_ref[...], w, preferred_element_type=jnp.float32
            ).astype(hw_ref.dtype)

        @pl.when(l > 0)
        def _():
            hw_ref[...] = jnp.dot(
                h_ref[...], w, preferred_element_type=jnp.float32
            ).astype(hw_ref.dtype)

    # Streamed aggregation of this row tile: (tm, n_p) @ (n_p, F), bf16 MXU,
    # f32 accumulation.
    y = jnp.dot(a_ref[...], hw_ref[...],
                preferred_element_type=jnp.float32) + b_ref[0]

    # Intermediate layers: ReLU + keep the rows resident in VMEM scratch.
    @pl.when(l < last_layer)
    def _():
        start = pl.multiple_of(i * tm, tm)
        h_ref[pl.ds(start, tm), :] = jnp.maximum(y, 0.0)

    # Last layer: write the output row tile (no ReLU).
    @pl.when(l == last_layer)
    def _():
        o_ref[...] = y.astype(o_ref.dtype)


# ----------------------------------------------------------------------------
# Host-side preparation (padding hoisted out of the per-call hot path)
# ----------------------------------------------------------------------------
def prepare_gcn(a_hat, params):
    in_feats = params["w1"].shape[0]
    h_feats = params["w1"].shape[1]
    out_feats = params["w3"].shape[1]
    n = a_hat.shape[0]

    n_p = max(_round_up(n, _LANE), _LANE)
    f_max = max(_round_up(f, _LANE) for f in (in_feats, h_feats, out_feats))

    # A_hat stored in bf16 (aggregation still accumulates in f32): halves the
    # HBM/VMEM footprint of the dominant operand and doubles MXU throughput.
    a_p = jnp.zeros((n_p, n_p), jnp.bfloat16).at[:n, :n].set(
        a_hat.astype(jnp.bfloat16))

    def pad_w(w):
        out = np.zeros((f_max, f_max), np.float32)
        out[: w.shape[0], : w.shape[1]] = np.asarray(w, np.float32)
        return out

    def pad_b(b):
        out = np.zeros((1, f_max), np.float32)
        out[0, : b.shape[0]] = np.asarray(b, np.float32)
        return out

    ws = jnp.asarray(np.stack([pad_w(params["w1"]),
                               pad_w(params["w2"]),
                               pad_w(params["w3"])]))          # (3, F, F) f32
    bs = jnp.asarray(np.stack([pad_b(params["b1"]),
                               pad_b(params["b2"]),
                               pad_b(params["b3"])]))          # (3, 1, F) f32

    vmem_budget = _vmem_budget_bytes()

    # Resident-path estimate (A bf16 + X/H/out f32 + weights + bf16 HW temp),
    # with 2x slack for double buffering and compiler-internal dot temps.
    resident_bytes = (2 * n_p * n_p
                      + 4 * n_p * f_max * 4
                      + ws.size * 4 + bs.size * 4
                      + 2 * n_p * f_max)
    use_resident = 2 * resident_bytes <= vmem_budget

    # Largest A row tile that divides n_p (HBM-roofline sweet spot is
    # 512-1024 rows) and fits the budget with double buffering.
    fixed = n_p * f_max * (4 + 4 + 2) + 3 * f_max * f_max * 4
    tm = _LANE
    for cand in (1024, 512, 256, 128):
        if n_p % cand != 0:
            continue
        need = fixed + 2 * cand * n_p * 2 + 2 * cand * f_max * 4
        if 2 * need <= vmem_budget or cand == 128:
            tm = cand
            break

    return dict(a_p=a_p, ws=ws, bs=bs, n=n, n_p=n_p, f_max=f_max,
                in_feats=in_feats, out_feats=out_feats,
                use_resident=use_resident, tm=tm,
                vmem_limit=int(vmem_budget))


# ----------------------------------------------------------------------------
# Forward
# ----------------------------------------------------------------------------
def gcn_forward(state, x):
    n, n_p, f_max = state["n"], state["n_p"], state["f_max"]
    out_feats = state["out_feats"]

    # Only X (tiny) is padded per call; A_hat / weights were padded once.
    x_p = jnp.zeros((n_p, f_max), jnp.float32).at[:n, : x.shape[1]].set(
        x.astype(jnp.float32))

    if state["use_resident"]:
        kernel = functools.partial(_gcn3_resident_kernel, n_layers=3)
        out_p = pl.pallas_call(
            kernel,
            out_shape=jax.ShapeDtypeStruct((n_p, f_max), jnp.float32),
            in_specs=[
                pl.BlockSpec((n_p, n_p), lambda: (0, 0)),        # A (bf16)
                pl.BlockSpec((n_p, f_max), lambda: (0, 0)),      # X
                pl.BlockSpec((3, f_max, f_max), lambda: (0, 0, 0)),  # W stack
                pl.BlockSpec((3, 1, f_max), lambda: (0, 0, 0)),      # b stack
            ],
            out_specs=pl.BlockSpec((n_p, f_max), lambda: (0, 0)),
            compiler_params=pltpu.CompilerParams(
                vmem_limit_bytes=state["vmem_limit"]),
        )(state["a_p"], x_p, state["ws"], state["bs"])
    else:
        tm = state["tm"]
        kernel = functools.partial(_gcn3_tiled_kernel, tm=tm)
        grid = (3, n_p // tm)
        out_p = pl.pallas_call(
            kernel,
            out_shape=jax.ShapeDtypeStruct((n_p, f_max), jnp.float32),
            grid_spec=pltpu.PrefetchScalarGridSpec(
                num_scalar_prefetch=0,
                grid=grid,
                in_specs=[
                    pl.BlockSpec((tm, n_p), lambda l, i: (i, 0)),        # A rows
                    pl.BlockSpec((n_p, f_max), lambda l, i: (0, 0)),     # X
                    pl.BlockSpec((1, f_max, f_max), lambda l, i: (l, 0, 0)),
                    pl.BlockSpec((1, 1, f_max), lambda l, i: (l, 0, 0)),
                ],
                out_specs=pl.BlockSpec((tm, f_max), lambda l, i: (i, 0)),
                scratch_shapes=[
                    pltpu.VMEM((n_p, f_max), jnp.float32),    # H (activations)
                    pltpu.VMEM((n_p, f_max), jnp.bfloat16),   # H @ W_l
                ],
            ),
            compiler_params=pltpu.CompilerParams(
                dimension_semantics=("arbitrary", "arbitrary"),
                vmem_limit_bytes=state["vmem_limit"]),
        )(state["a_p"], x_p, state["ws"], state["bs"])

    return out_p[:n, :out_feats]


# ----------------------------------------------------------------------------
# Parameter / graph construction helpers
# ----------------------------------------------------------------------------
def _glorot(key, shape):
    fan_in, fan_out = shape
    limit = jnp.sqrt(6.0 / (fan_in + fan_out))
    return jax.random.uniform(key, shape, jnp.float32, -limit, limit)


def init_params(key, in_feats, h_feats, out_feats):
    k1, k2, k3 = jax.random.split(key, 3)
    return {
        "w1": _glorot(k1, (in_feats, h_feats)),
        "b1": jnp.zeros((h_feats,), jnp.float32),
        "w2": _glorot(k2, (h_feats, h_feats)),
        "b2": jnp.zeros((h_feats,), jnp.float32),
        "w3": _glorot(k3, (h_feats, out_feats)),
        "b3": jnp.zeros((out_feats,), jnp.float32),
    }


def build_normalized_adjacency(num_nodes, edges):
    # undirected + self loops, then D^{-1/2} (A + I) D^{-1/2}; built in numpy.
    a = np.zeros((num_nodes, num_nodes), np.float32)
    for s, d in edges:
        a[s, d] = 1.0
        a[d, s] = 1.0
    a = a + np.eye(num_nodes, dtype=np.float32)
    deg = a.sum(axis=1)
    d_inv_sqrt = 1.0 / np.sqrt(np.maximum(deg, 1.0))
    a = a * d_inv_sqrt[:, None] * d_inv_sqrt[None, :]
    return jnp.asarray(a)


if __name__ == "__main__":
    num_nodes = 8
    in_feats, h_feats, out_feats = 16, 32, 8

    key = jax.random.PRNGKey(0)
    k_feat, k_param = jax.random.split(key)

    # deterministic small graph: ring + a couple of chords
    edges = [(i, (i + 1) % num_nodes) for i in range(num_nodes)] + [(0, 4), (2, 6)]
    a_hat = build_normalized_adjacency(num_nodes, edges)

    x = jax.random.normal(k_feat, (num_nodes, in_feats), jnp.float32)
    params = init_params(k_param, in_feats, h_feats, out_feats)

    # Padding / bf16 conversion of A_hat and the weights happens ONCE here.
    state = prepare_gcn(a_hat, params)

    fwd = jax.jit(functools.partial(gcn_forward, state))
    out = jax.block_until_ready(fwd(x))

    # Also exercise the streamed/tiled fallback (used when A_hat no longer
    # fits in VMEM) on the same small problem.
    state_tiled = dict(state, use_resident=False)
    fwd_tiled = jax.jit(functools.partial(gcn_forward, state_tiled))
    out_tiled = jax.block_until_ready(fwd_tiled(x))

    # pure-JAX f32 reference (same math, no Pallas)
    def ref_layer(a, h, w, b, relu):
        y = a @ (h @ w) + b[None, :]
        return jnp.maximum(y, 0.0) if relu else y

    ref = ref_layer(a_hat, x, params["w1"], params["b1"], True)
    ref = ref_layer(a_hat, ref, params["w2"], params["b2"], True)
    ref = ref_layer(a_hat, ref, params["w3"], params["b3"], False)

    assert out.shape == (num_nodes, out_feats)
    # bf16 A_hat / bf16 H@W operands (f32 accumulation) -> ~3 significant
    # digits on the streamed operands; compare against the f32 reference
    # with a correspondingly loose tolerance.
    assert jnp.allclose(out, ref, atol=3e-2, rtol=3e-2), float(
        jnp.max(jnp.abs(out - ref)))
    assert jnp.allclose(out_tiled, ref, atol=3e-2, rtol=3e-2), float(
        jnp.max(jnp.abs(out_tiled - ref)))

    print("KERNEL_OK")
</pallas_src>

<mosaic_0001>
module attributes {stable_mosaic.version = 11 : i64} {
  func.func @_gcn3_resident_kernel(%arg0: memref<128x128xbf16, #tpu.memory_space<vmem>>, %arg1: memref<128x128xf32, #tpu.memory_space<vmem>>, %arg2: memref<3x128x128xf32, #tpu.memory_space<vmem>>, %arg3: memref<3x1x128xf32, #tpu.memory_space<vmem>>, %arg4: memref<128x128xf32, #tpu.memory_space<vmem>>) attributes {dimension_semantics = [], scalar_prefetch = 0 : i64, scratch_operands = 0 : i64, tpu.core_type = #tpu.core_type<tc>} {
    %c0 = arith.constant 0 : index
    %c0_0 = arith.constant 0 : index
    %0 = vector.load %arg0[%c0, %c0_0] : memref<128x128xbf16, #tpu.memory_space<vmem>>, vector<128x128xbf16>
    %c0_1 = arith.constant 0 : index
    %c0_2 = arith.constant 0 : index
    %1 = vector.load %arg1[%c0_1, %c0_2] : memref<128x128xf32, #tpu.memory_space<vmem>>, vector<128x128xf32>
    %c0_3 = arith.constant 0 : index
    %c0_4 = arith.constant 0 : index
    %c0_5 = arith.constant 0 : index
    %2 = vector.load %arg2[%c0_3, %c0_4, %c0_5] : memref<3x128x128xf32, #tpu.memory_space<vmem>>, vector<1x128x128xf32>
    %3 = vector.shape_cast %2 : vector<1x128x128xf32> to vector<128x128xf32>
    %cst = arith.constant dense<0.000000e+00> : vector<128x128xf32>
    %4 = tpu.matmul %1, %3, %cst {dimension_numbers = #tpu.dot_dimension_numbers<[1], [0], [0], [1], [0, 0, 1, 1], [], []>} : vector<128x128xf32>, vector<128x128xf32>, vector<128x128xf32> -> vector<128x128xf32>
    %5 = arith.truncf %4 : vector<128x128xf32> to vector<128x128xbf16>
    %cst_6 = arith.constant dense<0.000000e+00> : vector<128x128xf32>
    %6 = tpu.matmul %0, %5, %cst_6 {dimension_numbers = #tpu.dot_dimension_numbers<[1], [0], [0], [1], [0, 0, 1, 1], [], []>} : vector<128x128xbf16>, vector<128x128xbf16>, vector<128x128xf32> -> vector<128x128xf32>
    %c0_7 = arith.constant 0 : index
    %c0_8 = arith.constant 0 : index
    %c0_9 = arith.constant 0 : index
    %7 = vector.load %arg3[%c0_7, %c0_8, %c0_9] : memref<3x1x128xf32, #tpu.memory_space<vmem>>, vector<1x1x128xf32>
    %8 = vector.shape_cast %7 : vector<1x1x128xf32> to vector<1x128xf32>
    %9 = vector.broadcast %8 : vector<1x128xf32> to vector<128x128xf32>
    %10 = arith.addf %6, %9 : vector<128x128xf32>
    %cst_10 = arith.constant 0.000000e+00 : f32
    %11 = vector.broadcast %cst_10 : f32 to vector<128x128xf32>
    %12 = arith.maximumf %10, %11 : vector<128x128xf32>
    %c1 = arith.constant 1 : index
    %c0_11 = arith.constant 0 : index
    %c0_12 = arith.constant 0 : index
    %13 = vector.load %arg2[%c1, %c0_11, %c0_12] : memref<3x128x128xf32, #tpu.memory_space<vmem>>, vector<1x128x128xf32>
    %14 = vector.shape_cast %13 : vector<1x128x128xf32> to vector<128x128xf32>
    %cst_13 = arith.constant dense<0.000000e+00> : vector<128x128xf32>
    %15 = tpu.matmul %12, %14, %cst_13 {dimension_numbers = #tpu.dot_dimension_numbers<[1], [0], [0], [1], [0, 0, 1, 1], [], []>} : vector<128x128xf32>, vector<128x128xf32>, vector<128x128xf32> -> vector<128x128xf32>
    %16 = arith.truncf %15 : vector<128x128xf32> to vector<128x128xbf16>
    %cst_14 = arith.constant dense<0.000000e+00> : vector<128x128xf32>
    %17 = tpu.matmul %0, %16, %cst_14 {dimension_numbers = #tpu.dot_dimension_numbers<[1], [0], [0], [1], [0, 0, 1, 1], [], []>} : vector<128x128xbf16>, vector<128x128xbf16>, vector<128x128xf32> -> vector<128x128xf32>
    %c1_15 = arith.constant 1 : index
    %c0_16 = arith.constant 0 : index
    %c0_17 = arith.constant 0 : index
    %18 = vector.load %arg3[%c1_15, %c0_16, %c0_17] : memref<3x1x128xf32, #tpu.memory_space<vmem>>, vector<1x1x128xf32>
    %19 = vector.shape_cast %18 : vector<1x1x128xf32> to vector<1x128xf32>
    %20 = vector.broadcast %19 : vector<1x128xf32> to vector<128x128xf32>
    %21 = arith.addf %17, %20 : vector<128x128xf32>
    %cst_18 = arith.constant 0.000000e+00 : f32
    %22 = vector.broadcast %cst_18 : f32 to vector<128x128xf32>
    %23 = arith.maximumf %21, %22 : vector<128x128xf32>
    %c2 = arith.constant 2 : index
    %c0_19 = arith.constant 0 : index
    %c0_20 = arith.constant 0 : index
    %24 = vector.load %arg2[%c2, %c0_19, %c0_20] : memref<3x128x128xf32, #tpu.memory_space<vmem>>, vector<1x128x128xf32>
    %25 = vector.shape_cast %24 : vector<1x128x128xf32> to vector<128x128xf32>
    %cst_21 = arith.constant dense<0.000000e+00> : vector<128x128xf32>
    %26 = tpu.matmul %23, %25, %cst_21 {dimension_numbers = #tpu.dot_dimension_numbers<[1], [0], [0], [1], [0, 0, 1, 1], [], []>} : vector<128x128xf32>, vector<128x128xf32>, vector<128x128xf32> -> vector<128x128xf32>
    %27 = arith.truncf %26 : vector<128x128xf32> to vector<128x128xbf16>
    %cst_22 = arith.constant dense<0.000000e+00> : vector<128x128xf32>
    %28 = tpu.matmul %0, %27, %cst_22 {dimension_numbers = #tpu.dot_dimension_numbers<[1], [0], [0], [1], [0, 0, 1, 1], [], []>} : vector<128x128xbf16>, vector<128x128xbf16>, vector<128x128xf32> -> vector<128x128xf32>
    %c2_23 = arith.constant 2 : index
    %c0_24 = arith.constant 0 : index
    %c0_25 = arith.constant 0 : index
    %29 = vector.load %arg3[%c2_23, %c0_24, %c0_25] : memref<3x1x128xf32, #tpu.memory_space<vmem>>, vector<1x1x128xf32>
    %30 = vector.shape_cast %29 : vector<1x1x128xf32> to vector<1x128xf32>
    %31 = vector.broadcast %30 : vector<1x128xf32> to vector<128x128xf32>
    %32 = arith.addf %28, %31 : vector<128x128xf32>
    %c0_26 = arith.constant 0 : index
    %c0_27 = arith.constant 0 : index
    %33 = vector.load %arg4[%c0_26, %c0_27] : memref<128x128xf32, #tpu.memory_space<vmem>>, vector<128x128xf32>
    tpu.vector_store %arg4[%c0_26, %c0_27], %32 {strides = array<i32>} : memref<128x128xf32, #tpu.memory_space<vmem>>, vector<128x128xf32>,
    return
  }
}

</mosaic_0001>

<llo_original>
// kernel: gcn_forward.1
$region0: #{gcn_forward.1}
  #allocation0 [shape = 'u32[]', space=smem, size = 0x4, offset = 0x4, fixed_abs, tag = 'smem constant byte address 0x4 - core index']
  #allocation1 [shape = 'u32[144,128]{1,0:T(1,128)}', space=vmem, size = 0x12000, scoped, tag = 'internal scratch']
  %s0 = inlined_call_operand.vmem [shape: bf16[128,128], index: 0, kind: input, shape index: {}]
  %s1 = inlined_call_operand.vmem [shape: f32[128,128], index: 1, kind: input, shape index: {}]
  %s2 = inlined_call_operand.hbm [shape: f32[3,128,128], index: 2, kind: input, shape index: {}]
  %s3 = inlined_call_operand.vmem [shape: f32[3,1,128], index: 3, kind: input, shape index: {}]
  %s4 = inlined_call_operand.vmem [shape: f32[128,128], index: 4, kind: output, shape index: {}]
  %s5 = sld [smem:[#allocation0]]
  $region30: #{gcn_forward.1} parent=0
    _
  %s7 = ssub.s32 1, %s5
  %s8 = scalar_select 0, %s7, %s5
  $region1: #{gcn_forward.1} parent=0
    #allocation2 [shape = 'u8[196608]{0}', space=vmem, size = 0x30000, scoped, tag = 'input window, operand 2, single buffered']
    #allocation3 [shape = 's32[1]{0}', space=sflag, size = 0x4, scoped, tag = 'scoped memory for gcn_forward.1']
    %9 = vsyncpa [#allocation3], 0
    // Predicated region
    $region2: #{gcn_forward.1} parent=1 // pred_check
      _
    $region3: #{gcn_forward.1} parent=1 // pred_check_branch
      %11 = sbr.rel (0) target = $region5
    $region4: #{gcn_forward.1} parent=1 // pred_region
      _
    $region5: #{gcn_forward.1} parent=1 // pred_fallthru
      _
    // Predicated region
    $region6: #{gcn_forward.1} parent=1 // pred_check
      _
    $region7: #{gcn_forward.1} parent=1 // pred_check_branch
      %13 = sbr.rel (0) target = $region9
    $region8: #{gcn_forward.1} parent=1 // pred_region
      _
    $region9: #{gcn_forward.1} parent=1 // pred_fallthru
      _
    // Predicated region
    $region10: #{gcn_forward.1} parent=1 // pred_check
      _
    $region11: #{gcn_forward.1} parent=1 // pred_check_branch
      %15 = sbr.rel (0) target = $region13
    $region12: #{gcn_forward.1} parent=1 // pred_region
      %s17 = ssub.s32 6144, 6144
      %18 = vsyncadd [#allocation3], %s17
      %s19 = sshll.u32 [#allocation2], 4
      %s20 = int_to_ptr.vmem [resolvable:$true] %s19
      %25 = dma.hbm_to_vmem [thread:$0]  %s2, 6144, %s20, [#allocation3], 128, 128, 8
    $region13: #{gcn_forward.1} parent=1 // pred_fallthru
      _
    // Predicated region
    $region14: #{gcn_forward.1} parent=1 // pred_check
      _
    $region15: #{gcn_forward.1} parent=1 // pred_check_branch
      %27 = sbr.rel (0) target = $region17
    $region16: #{gcn_forward.1} parent=1 // pred_region
      _
    $region17: #{gcn_forward.1} parent=1 // pred_fallthru
      _
    // Predicated region
    $region18: #{gcn_forward.1} parent=1 // pred_check
      _
    $region19: #{gcn_forward.1} parent=1 // pred_check_branch
      %29 = sbr.rel (0) target = $region21
    $region20: #{gcn_forward.1} parent=1 // pred_region
      %30 = dma.done [#allocation3], 6144
    $region21: #{gcn_forward.1} parent=1 // pred_fallthru
      _
    %v32 = vld [vmem:[%s0] sm:$0xf]
    %v33 = vld [vmem:[%s0 + $0x4] sm:$0xf]
    %v34 = vld [vmem:[%s0 + $0x8] sm:$0xf]
    %v35 = vld [vmem:[%s0 + $0xc] sm:$0xf]
    %v36 = vld [vmem:[%s0 + $0x10] sm:$0xf]
    %v37 = vld [vmem:[%s0 + $0x14] sm:$0xf]
    %v38 = vld [vmem:[%s0 + $0x18] sm:$0xf]
    %v39 = vld [vmem:[%s0 + $0x1c] sm:$0xf]
    %v40 = vld [vmem:[%s0 + $0x20] sm:$0xf]
    %v41 = vld [vmem:[%s0 + $0x24] sm:$0xf]
    %v42 = vld [vmem:[%s0 + $0x28] sm:$0xf]
    %v43 = vld [vmem:[%s0 + $0x2c] sm:$0xf]
    %v44 = vld [vmem:[%s0 + $0x30] sm:$0xf]
    %v45 = vld [vmem:[%s0 + $0x34] sm:$0xf]
    %v46 = vld [vmem:[%s0 + $0x38] sm:$0xf]
    %v47 = vld [vmem:[%s0 + $0x3c] sm:$0xf]
    %v48 = vld [vmem:[%s1] sm:$0xff]
    %v49 = vld [vmem:[%s1 + $0x8] sm:$0xff]
    %v50 = vld [vmem:[%s1 + $0x10] sm:$0xff]
    %v51 = vld [vmem:[%s1 + $0x18] sm:$0xff]
    %v52 = vld [vmem:[%s1 + $0x20] sm:$0xff]
    %v53 = vld [vmem:[%s1 + $0x28] sm:$0xff]
    %v54 = vld [vmem:[%s1 + $0x30] sm:$0xff]
    %v55 = vld [vmem:[%s1 + $0x38] sm:$0xff]
    %v56 = vld [vmem:[%s1 + $0x40] sm:$0xff]
    %v57 = vld [vmem:[%s1 + $0x48] sm:$0xff]
    %v58 = vld [vmem:[%s1 + $0x50] sm:$0xff]
    %v59 = vld [vmem:[%s1 + $0x58] sm:$0xff]
    %v60 = vld [vmem:[%s1 + $0x60] sm:$0xff]
    %v61 = vld [vmem:[%s1 + $0x68] sm:$0xff]
    %v62 = vld [vmem:[%s1 + $0x70] sm:$0xff]
    %v63 = vld [vmem:[%s1 + $0x78] sm:$0xff]
    %v64 = vld [vmem:[#allocation2] sm:$0xff]
    %v65 = vld [vmem:[#allocation2 + $0x8] sm:$0xff]
    %v66 = vld [vmem:[#allocation2 + $0x10] sm:$0xff]
    %v67 = vld [vmem:[#allocation2 + $0x18] sm:$0xff]
    %v68 = vld [vmem:[#allocation2 + $0x20] sm:$0xff]
    %v69 = vld [vmem:[#allocation2 + $0x28] sm:$0xff]
    %v70 = vld [vmem:[#allocation2 + $0x30] sm:$0xff]
    %v71 = vld [vmem:[#allocation2 + $0x38] sm:$0xff]
    %v72 = vld [vmem:[#allocation2 + $0x40] sm:$0xff]
    %v73 = vld [vmem:[#allocation2 + $0x48] sm:$0xff]
    %v74 = vld [vmem:[#allocation2 + $0x50] sm:$0xff]
    %v75 = vld [vmem:[#allocation2 + $0x58] sm:$0xff]
    %v76 = vld [vmem:[#allocation2 + $0x60] sm:$0xff]
    %v77 = vld [vmem:[#allocation2 + $0x68] sm:$0xff]
    %v78 = vld [vmem:[#allocation2 + $0x70] sm:$0xff]
    %v79 = vld [vmem:[#allocation2 + $0x78] sm:$0xff]
    %80 = vmatprep.subr.mxu0 0.0
    %81 = vmatpush1.msra.mxu0 %v64
    %82 = vmatprep.subr.mxu0 0.0
    %83 = vmatpush1.msra.mxu0 %v65
    %84 = vmatprep.subr.mxu0 0.0
    %85 = vmatpush1.msra.mxu0 %v66
    %86 = vmatprep.subr.mxu0 0.0
    %87 = vmatpush1.msra.mxu0 %v67
    %88 = vmatprep.subr.mxu0 0.0
    %89 = vmatpush1.msra.mxu0 %v68
    %90 = vmatprep.subr.mxu0 0.0
    %91 = vmatpush1.msra.mxu0 %v69
    %92 = vmatprep.subr.mxu0 0.0
    %93 = vmatpush1.msra.mxu0 %v70
    %94 = vmatprep.subr.mxu0 0.0
    %95 = vmatpush1.msra.mxu0 %v71
    %96 = vmatprep.subr.mxu0 0.0
    %97 = vmatpush1.msra.mxu0 %v72
    %98 = vmatprep.subr.mxu0 0.0
    %99 = vmatpush1.msra.mxu0 %v73
    %100 = vmatprep.subr.mxu0 0.0
    %101 = vmatpush1.msra.mxu0 %v74
    %102 = vmatprep.subr.mxu0 0.0
    %103 = vmatpush1.msra.mxu0 %v75
    %104 = vmatprep.subr.mxu0 0.0
    %105 = vmatpush1.msra.mxu0 %v76
    %106 = vmatprep.subr.mxu0 0.0
    %107 = vmatpush1.msra.mxu0 %v77
    %108 = vmatprep.subr.mxu0 0.0
    %109 = vmatpush1.msra.mxu0 %v78
    %110 = vmatprep.subr.mxu0 0.0
    %111 = vmatpush1.msra.mxu0 %v79
    %112 = vmatprep.subr.mxu0 0.0
    %113 = vmatpush1.msra.mxu0 0.0
    %114 = vmatprep.subr.mxu0 0.0
    %115 = vmatpush1.msra.mxu0 0.0
    %116 = vmatprep.subr.mxu0 0.0
    %117 = vmatpush1.msra.mxu0 0.0
    %118 = vmatprep.subr.mxu0 0.0
    %119 = vmatpush1.msra.mxu0 0.0
    %120 = vmatprep.subr.mxu0 0.0
    %121 = vmatpush1.msra.mxu0 0.0
    %122 = vmatprep.subr.mxu0 0.0
    %123 = vmatpush1.msra.mxu0 0.0
    %124 = vmatprep.subr.mxu0 0.0
    %125 = vmatpush1.msra.mxu0 0.0
    %126 = vmatprep.subr.mxu0 0.0
    %127 = vmatpush1.msra.mxu0 0.0
    %128 = vmatprep.subr.mxu0 0.0
    %129 = vmatpush1.msra.mxu0 0.0
    %130 = vmatprep.subr.mxu0 0.0
    %131 = vmatpush1.msra.mxu0 0.0
    %132 = vmatprep.subr.mxu0 0.0
    %133 = vmatpush1.msra.mxu0 0.0
    %134 = vmatprep.subr.mxu0 0.0
    %135 = vmatpush1.msra.mxu0 0.0
    %136 = vmatprep.subr.mxu0 0.0
    %137 = vmatpush1.msra.mxu0 0.0
    %138 = vmatprep.subr.mxu0 0.0
    %139 = vmatpush1.msra.mxu0 0.0
    %140 = vmatprep.subr.mxu0 0.0
    %141 = vmatpush1.msra.mxu0 0.0
    %142 = vmatprep.subr.mxu0 0.0
    %143 = vmatpush1.msra.mxu0 0.0
    %144 = vmatprep.mubr.f32.mxu0 0.0
    %145 = vmatmul.mubr.f32.gmra.mrb[0].mxu0 %v48
    %v146 = vpop.f32.mrb[0].mxu0
    %v147 = vadd.f32 0.0, %v146
    %v148 = vpop.f32.mrb[0].mxu0
    %149 = vmatprep.mubr.f32.mxu0 0.0
    %150 = vmatmul.mubr.f32.gmra.mrb[0].mxu0 %v49
    %v151 = vpop.f32.mrb[0].mxu0
    %v152 = vadd.f32 0.0, %v151
    %v153 = vpop.f32.mrb[0].mxu0
    %154 = vmatprep.mubr.f32.mxu0 0.0
    %155 = vmatmul.mubr.f32.gmra.mrb[0].mxu0 %v50
    %v156 = vpop.f32.mrb[0].mxu0
    %v157 = vadd.f32 0.0, %v156
    %v158 = vpop.f32.mrb[0].mxu0
    %159 = vmatprep.mubr.f32.mxu0 0.0
    %160 = vmatmul.mubr.f32.gmra.mrb[0].mxu0 %v51
    %v161 = vpop.f32.mrb[0].mxu0
    %v162 = vadd.f32 0.0, %v161
    %v163 = vpop.f32.mrb[0].mxu0
    %164 = vmatprep.mubr.f32.mxu0 0.0
    %165 = vmatmul.mubr.f32.gmra.mrb[0].mxu0 %v52
    %v166 = vpop.f32.mrb[0].mxu0
    %v167 = vadd.f32 0.0, %v166
    %v168 = vpop.f32.mrb[0].mxu0
    %169 = vmatprep.mubr.f32.mxu0 0.0
    %170 = vmatmul.mubr.f32.gmra.mrb[0].mxu0 %v53
    %v171 = vpop.f32.mrb[0].mxu0
    %v172 = vadd.f32 0.0, %v171
    %v173 = vpop.f32.mrb[0].mxu0
    %174 = vmatprep.mubr.f32.mxu0 0.0
    %175 = vmatmul.mubr.f32.gmra.mrb[0].mxu0 %v54
    %v176 = vpop.f32.mrb[0].mxu0
    %v177 = vadd.f32 0.0, %v176
    %v178 = vpop.f32.mrb[0].mxu0
    %179 = vmatprep.mubr.f32.mxu0 0.0
    %180 = vmatmul.mubr.f32.gmra.mrb[0].mxu0 %v55
    %v181 = vpop.f32.mrb[0].mxu0
    %v182 = vadd.f32 0.0, %v181
    %v183 = vpop.f32.mrb[0].mxu0
    %184 = vmatprep.mubr.f32.mxu0 0.0
    %185 = vmatmul.mubr.f32.gmra.mrb[0].mxu0 %v56
    %v186 = vpop.f32.mrb[0].mxu0
    %v187 = vadd.f32 0.0, %v186
    %v188 = vpop.f32.mrb[0].mxu0
    %189 = vmatprep.mubr.f32.mxu0 0.0
    %190 = vmatmul.mubr.f32.gmra.mrb[0].mxu0 %v57
    %v191 = vpop.f32.mrb[0].mxu0
    %v192 = vadd.f32 0.0, %v191
    %v193 = vpop.f32.mrb[0].mxu0
    %194 = vmatprep.mubr.f32.mxu0 0.0
    %195 = vmatmul.mubr.f32.gmra.mrb[0].mxu0 %v58
    %v196 = vpop.f32.mrb[0].mxu0
    %v197 = vadd.f32 0.0, %v196
    %v198 = vpop.f32.mrb[0].mxu0
    %199 = vmatprep.mubr.f32.mxu0 0.0
    %200 = vmatmul.mubr.f32.gmra.mrb[0].mxu0 %v59
    %v201 = vpop.f32.mrb[0].mxu0
    %v202 = vadd.f32 0.0, %v201
    %v203 = vpop.f32.mrb[0].mxu0
    %204 = vmatprep.mubr.f32.mxu0 0.0
    %205 = vmatmul.mubr.f32.gmra.mrb[0].mxu0 %v60
    %v206 = vpop.f32.mrb[0].mxu0
    %v207 = vadd.f32 0.0, %v206
    %v208 = vpop.f32.mrb[0].mxu0
    %209 = vmatprep.mubr.f32.mxu0 0.0
    %210 = vmatmul.mubr.f32.gmra.mrb[0].mxu0 %v61
    %v211 = vpop.f32.mrb[0].mxu0
    %v212 = vadd.f32 0.0, %v211
    %v213 = vpop.f32.mrb[0].mxu0
    %214 = vmatprep.mubr.f32.mxu0 0.0
    %215 = vmatmul.mubr.f32.gmra.mrb[0].mxu0 %v62
    %v216 = vpop.f32.mrb[0].mxu0
    %v217 = vadd.f32 0.0, %v216
    %v218 = vpop.f32.mrb[0].mxu0
    %219 = vmatprep.mubr.f32.mxu0 0.0
    %220 = vmatmul.mubr.f32.gmra.mrb[0].mxu0 %v63
    %v221 = vpop.f32.mrb[0].mxu0
    %v222 = vadd.f32 0.0, %v221
    %v223 = vpop.f32.mrb[0].mxu0
    %224 = vdwg.mxu0
    %v225 = vpack.c.bf16 %v152, %v147
    %v226 = vpack.c.bf16 %v162, %v157
    %v227 = vpack.c.bf16 %v172, %v167
    %v228 = vpack.c.bf16 %v182, %v177
    %v229 = vpack.c.bf16 %v192, %v187
    %v230 = vpack.c.bf16 %v202, %v197
    %v231 = vpack.c.bf16 %v212, %v207
    %v232 = vpack.c.bf16 %v222, %v217
    %v233 = vld [vmem:[%s3] sm:$0x1]
    %v235 = vlaneseq
    %v236 = vshrl.u32 %v235, 7
    %v237 = vsub.s32 0, %v236
    %v238 = vrot.slane %v233, %v237
    %v256 = vunpack.c.l.b16 %v32
    %v257 = vunpack.c.l.b16 %v33
    %v258 = vunpack.c.l.b16 %v34
    %v259 = vunpack.c.l.b16 %v35
    %v260 = vunpack.c.l.b16 %v36
    %v261 = vunpack.c.l.b16 %v37
    %v262 = vunpack.c.l.b16 %v38
    %v263 = vunpack.c.l.b16 %v39
    %v264 = vunpack.c.l.b16 %v40
    %v265 = vunpack.c.l.b16 %v41
    %v266 = vunpack.c.l.b16 %v42
    %v267 = vunpack.c.l.b16 %v43
    %v268 = vunpack.c.l.b16 %v44
    %v269 = vunpack.c.l.b16 %v45
    %v270 = vunpack.c.l.b16 %v46
    %v271 = vunpack.c.l.b16 %v47
    %v272 = vpack.c.b16 %v257, %v256
    %v273 = vpack.c.b16 %v259, %v258
    %v274 = vpack.c.b16 %v261, %v260
    %v275 = vpack.c.b16 %v263, %v262
    %v276 = vpack.c.b16 %v265, %v264
    %v277 = vpack.c.b16 %v267, %v266
    %v278 = vpack.c.b16 %v269, %v268
    %v279 = vpack.c.b16 %v271, %v270
    %288 = vmatprep.subr.bf16.mxu0 0
    %289 = vmatpush1.bf16.msra.mxu0 %v225
    %290 = vmatprep.subr.bf16.mxu0 0
    %291 = vmatpush1.bf16.msra.mxu0 %v226
    %292 = vmatprep.subr.bf16.mxu0 0
    %293 = vmatpush1.bf16.msra.mxu0 %v227
    %294 = vmatprep.subr.bf16.mxu0 0
    %295 = vmatpush1.bf16.msra.mxu0 %v228
    %296 = vmatprep.subr.bf16.mxu0 0
    %297 = vmatpush1.bf16.msra.mxu0 %v229
    %298 = vmatprep.subr.bf16.mxu0 0
    %299 = vmatpush1.bf16.msra.mxu0 %v230
    %300 = vmatprep.subr.bf16.mxu0 0
    %301 = vmatpush1.bf16.msra.mxu0 %v231
    %302 = vmatprep.subr.bf16.mxu0 0
    %303 = vmatpush1.bf16.msra.mxu0 %v232
    %304 = vmatprep.subr.bf16.mxu0 0
    %305 = vmatpush1.bf16.msra.mxu0 0
    %306 = vmatprep.subr.bf16.mxu0 0
    %307 = vmatpush1.bf16.msra.mxu0 0
    %308 = vmatprep.subr.bf16.mxu0 0
    %309 = vmatpush1.bf16.msra.mxu0 0
    %310 = vmatprep.subr.bf16.mxu0 0
    %311 = vmatpush1.bf16.msra.mxu0 0
    %312 = vmatprep.subr.bf16.mxu0 0
    %313 = vmatpush1.bf16.msra.mxu0 0
    %314 = vmatprep.subr.bf16.mxu0 0
    %315 = vmatpush1.bf16.msra.mxu0 0
    %316 = vmatprep.subr.bf16.mxu0 0
    %317 = vmatpush1.bf16.msra.mxu0 0
    %318 = vmatprep.subr.bf16.mxu0 0
    %319 = vmatpush1.bf16.msra.mxu0 0
    %320 = vmatprep.mubr.bf16.mxu0 0
    %321 = vmatmul.mubr.bf16.gmra.mrb[0].mxu0 %v272
    %v322 = vpop.f32.mrb[0].mxu0
    %v323 = vadd.f32 %v238, %v322
    %v324 = vpop.f32.mrb[0].mxu0
    %v325 = vpop.f32.mrb[0].mxu0
    %v326 = vadd.f32 %v238, %v325
    %v327 = vpop.f32.mrb[0].mxu0
    %328 = vmatprep.mubr.bf16.mxu0 0
    %329 = vmatmul.mubr.bf16.gmra.mrb[0].mxu0 %v273
    %v330 = vpop.f32.mrb[0].mxu0
    %v331 = vadd.f32 %v238, %v330
    %v332 = vpop.f32.mrb[0].mxu0
    %v333 = vpop.f32.mrb[0].mxu0
    %v334 = vadd.f32 %v238, %v333
    %v335 = vpop.f32.mrb[0].mxu0
    %336 = vmatprep.mubr.bf16.mxu0 0
    %337 = vmatmul.mubr.bf16.gmra.mrb[0].mxu0 %v274
    %v338 = vpop.f32.mrb[0].mxu0
    %v339 = vadd.f32 %v238, %v338
    %v340 = vpop.f32.mrb[0].mxu0
    %v341 = vpop.f32.mrb[0].mxu0
    %v342 = vadd.f32 %v238, %v341
    %v343 = vpop.f32.mrb[0].mxu0
    %344 = vmatprep.mubr.bf16.mxu0 0
    %345 = vmatmul.mubr.bf16.gmra.mrb[0].mxu0 %v275
    %v346 = vpop.f32.mrb[0].mxu0
    %v347 = vadd.f32 %v238, %v346
    %v348 = vpop.f32.mrb[0].mxu0
    %v349 = vpop.f32.mrb[0].mxu0
    %v350 = vadd.f32 %v238, %v349
    %v351 = vpop.f32.mrb[0].mxu0
    %352 = vmatprep.mubr.bf16.mxu0 0
    %353 = vmatmul.mubr.bf16.gmra.mrb[0].mxu0 %v276
    %v354 = vpop.f32.mrb[0].mxu0
    %v355 = vadd.f32 %v238, %v354
    %v356 = vpop.f32.mrb[0].mxu0
    %v357 = vpop.f32.mrb[0].mxu0
    %v358 = vadd.f32 %v238, %v357
    %v359 = vpop.f32.mrb[0].mxu0
    %360 = vmatprep.mubr.bf16.mxu0 0
    %361 = vmatmul.mubr.bf16.gmra.mrb[0].mxu0 %v277
    %v362 = vpop.f32.mrb[0].mxu0
    %v363 = vadd.f32 %v238, %v362
    %v364 = vpop.f32.mrb[0].mxu0
    %v365 = vpop.f32.mrb[0].mxu0
    %v366 = vadd.f32 %v238, %v365
    %v367 = vpop.f32.mrb[0].mxu0
    %368 = vmatprep.mubr.bf16.mxu0 0
    %369 = vmatmul.mubr.bf16.gmra.mrb[0].mxu0 %v278
    %v370 = vpop.f32.mrb[0].mxu0
    %v371 = vadd.f32 %v238, %v370
    %v372 = vpop.f32.mrb[0].mxu0
    %v373 = vpop.f32.mrb[0].mxu0
    %v374 = vadd.f32 %v238, %v373
    %v375 = vpop.f32.mrb[0].mxu0
    %376 = vmatprep.mubr.bf16.mxu0 0
    %377 = vmatmul.mubr.bf16.gmra.mrb[0].mxu0 %v279
    %v378 = vpop.f32.mrb[0].mxu0
    %v379 = vadd.f32 %v238, %v378
    %v380 = vpop.f32.mrb[0].mxu0
    %v381 = vpop.f32.mrb[0].mxu0
    %v382 = vadd.f32 %v238, %v381
    %v383 = vpop.f32.mrb[0].mxu0
    %384 = vdwg.mxu0
    %v385 = vmax.f32 %v323, 0.0
    %v386 = vmax.f32 %v326, 0.0
    %v387 = vmax.f32 %v331, 0.0
    %v388 = vmax.f32 %v334, 0.0
    %v389 = vmax.f32 %v339, 0.0
    %v390 = vmax.f32 %v342, 0.0
    %v391 = vmax.f32 %v347, 0.0
    %v392 = vmax.f32 %v350, 0.0
    %v393 = vmax.f32 %v355, 0.0
    %v394 = vmax.f32 %v358, 0.0
    %v395 = vmax.f32 %v363, 0.0
    %v396 = vmax.f32 %v366, 0.0
    %v397 = vmax.f32 %v371, 0.0
    %v398 = vmax.f32 %v374, 0.0
    %v399 = vmax.f32 %v379, 0.0
    %v400 = vmax.f32 %v382, 0.0
    %s401 = scalar_lea.vmem [#allocation2], 128
    %v402 = vld [vmem:[%s401] sm:$0xff]
    %v403 = vld [vmem:[%s401 + $0x8] sm:$0xff]
    %v404 = vld [vmem:[%s401 + $0x10] sm:$0xff]
    %v405 = vld [vmem:[%s401 + $0x18] sm:$0xff]
    %v406 = vld [vmem:[%s401 + $0x20] sm:$0xff]
    %v407 = vld [vmem:[%s401 + $0x28] sm:$0xff]
    %v408 = vld [vmem:[%s401 + $0x30] sm:$0xff]
    %v409 = vld [vmem:[%s401 + $0x38] sm:$0xff]
    %v410 = vld [vmem:[%s401 + $0x40] sm:$0xff]
    %v411 = vld [vmem:[%s401 + $0x48] sm:$0xff]
    %v412 = vld [vmem:[%s401 + $0x50] sm:$0xff]
    %v413 = vld [vmem:[%s401 + $0x58] sm:$0xff]
    %v414 = vld [vmem:[%s401 + $0x60] sm:$0xff]
    %v415 = vld [vmem:[%s401 + $0x68] sm:$0xff]
    %v416 = vld [vmem:[%s401 + $0x70] sm:$0xff]
    %v417 = vld [vmem:[%s401 + $0x78] sm:$0xff]
    %418 = vmatprep.subr.mxu0 0.0
    %419 = vmatpush1.msra.mxu0 %v402
    %420 = vmatprep.subr.mxu0 0.0
    %421 = vmatpush1.msra.mxu0 %v403
    %422 = vmatprep.subr.mxu0 0.0
    %423 = vmatpush1.msra.mxu0 %v404
    %424 = vmatprep.subr.mxu0 0.0
    %425 = vmatpush1.msra.mxu0 %v405
    %426 = vmatprep.subr.mxu0 0.0
    %427 = vmatpush1.msra.mxu0 %v406
    %428 = vmatprep.subr.mxu0 0.0
    %429 = vmatpush1.msra.mxu0 %v407
    %430 = vmatprep.subr.mxu0 0.0
    %431 = vmatpush1.msra.mxu0 %v408
    %432 = vmatprep.subr.mxu0 0.0
    %433 = vmatpush1.msra.mxu0 %v409
    %434 = vmatprep.subr.mxu0 0.0
    %435 = vmatpush1.msra.mxu0 %v410
    %436 = vmatprep.subr.mxu0 0.0
    %437 = vmatpush1.msra.mxu0 %v411
    %438 = vmatprep.subr.mxu0 0.0
    %439 = vmatpush1.msra.mxu0 %v412
    %440 = vmatprep.subr.mxu0 0.0
    %441 = vmatpush1.msra.mxu0 %v413
    %442 = vmatprep.subr.mxu0 0.0
    %443 = vmatpush1.msra.mxu0 %v414
    %444 = vmatprep.subr.mxu0 0.0
    %445 = vmatpush1.msra.mxu0 %v415
    %446 = vmatprep.subr.mxu0 0.0
    %447 = vmatpush1.msra.mxu0 %v416
    %448 = vmatprep.subr.mxu0 0.0
    %449 = vmatpush1.msra.mxu0 %v417
    %450 = vmatprep.subr.mxu0 0.0
    %451 = vmatpush1.msra.mxu0 0.0
    %452 = vmatprep.subr.mxu0 0.0
    %453 = vmatpush1.msra.mxu0 0.0
    %454 = vmatprep.subr.mxu0 0.0
    %455 = vmatpush1.msra.mxu0 0.0
    %456 = vmatprep.subr.mxu0 0.0
    %457 = vmatpush1.msra.mxu0 0.0
    %458 = vmatprep.subr.mxu0 0.0
    %459 = vmatpush1.msra.mxu0 0.0
    %460 = vmatprep.subr.mxu0 0.0
    %461 = vmatpush1.msra.mxu0 0.0
    %462 = vmatprep.subr.mxu0 0.0
    %463 = vmatpush1.msra.mxu0 0.0
    %464 = vmatprep.subr.mxu0 0.0
    %465 = vmatpush1.msra.mxu0 0.0
    %466 = vmatprep.subr.mxu0 0.0
    %467 = vmatpush1.msra.mxu0 0.0
    %468 = vmatprep.subr.mxu0 0.0
    %469 = vmatpush1.msra.mxu0 0.0
    %470 = vmatprep.subr.mxu0 0.0
    %471 = vmatpush1.msra.mxu0 0.0
    %472 = vmatprep.subr.mxu0 0.0
    %473 = vmatpush1.msra.mxu0 0.0
    %474 = vmatprep.subr.mxu0 0.0
    %475 = vmatpush1.msra.mxu0 0.0
    %476 = vmatprep.subr.mxu0 0.0
    %477 = vmatpush1.msra.mxu0 0.0
    %478 = vmatprep.subr.mxu0 0.0
    %479 = vmatpush1.msra.mxu0 0.0
    %480 = vmatprep.subr.mxu0 0.0
    %481 = vmatpush1.msra.mxu0 0.0
    %482 = vmatprep.mubr.f32.mxu0 0.0
    %483 = vmatmul.mubr.f32.gmra.mrb[0].mxu0 %v385
    %v484 = vpop.f32.mrb[0].mxu0
    %v485 = vadd.f32 0.0, %v484
    %v486 = vpop.f32.mrb[0].mxu0
    %487 = vmatprep.mubr.f32.mxu0 0.0
    %488 = vmatmul.mubr.f32.gmra.mrb[0].mxu0 %v386
    %v489 = vpop.f32.mrb[0].mxu0
    %v490 = vadd.f32 0.0, %v489
    %v491 = vpop.f32.mrb[0].mxu0
    %492 = vmatprep.mubr.f32.mxu0 0.0
    %493 = vmatmul.mubr.f32.gmra.mrb[0].mxu0 %v387
    %v494 = vpop.f32.mrb[0].mxu0
    %v495 = vadd.f32 0.0, %v494
    %v496 = vpop.f32.mrb[0].mxu0
    %497 = vmatprep.mubr.f32.mxu0 0.0
    %498 = vmatmul.mubr.f32.gmra.mrb[0].mxu0 %v388
    %v499 = vpop.f32.mrb[0].mxu0
    %v500 = vadd.f32 0.0, %v499
    %v501 = vpop.f32.mrb[0].mxu0
    %502 = vmatprep.mubr.f32.mxu0 0.0
    %503 = vmatmul.mubr.f32.gmra.mrb[0].mxu0 %v389
    %v504 = vpop.f32.mrb[0].mxu0
    %v505 = vadd.f32 0.0, %v504
    %v506 = vpop.f32.mrb[0].mxu0
    %507 = vmatprep.mubr.f32.mxu0 0.0
    %508 = vmatmul.mubr.f32.gmra.mrb[0].mxu0 %v390
    %v509 = vpop.f32.mrb[0].mxu0
    %v510 = vadd.f32 0.0, %v509
    %v511 = vpop.f32.mrb[0].mxu0
    %512 = vmatprep.mubr.f32.mxu0 0.0
    %513 = vmatmul.mubr.f32.gmra.mrb[0].mxu0 %v391
    %v514 = vpop.f32.mrb[0].mxu0
    %v515 = vadd.f32 0.0, %v514
    %v516 = vpop.f32.mrb[0].mxu0
    %517 = vmatprep.mubr.f32.mxu0 0.0
    %518 = vmatmul.mubr.f32.gmra.mrb[0].mxu0 %v392
    %v519 = vpop.f32.mrb[0].mxu0
    %v520 = vadd.f32 0.0, %v519
    %v521 = vpop.f32.mrb[0].mxu0
    %522 = vmatprep.mubr.f32.mxu0 0.0
    %523 = vmatmul.mubr.f32.gmra.mrb[0].mxu0 %v393
    %v524 = vpop.f32.mrb[0].mxu0
    %v525 = vadd.f32 0.0, %v524
    %v526 = vpop.f32.mrb[0].mxu0
    %527 = vmatprep.mubr.f32.mxu0 0.0
    %528 = vmatmul.mubr.f32.gmra.mrb[0].mxu0 %v394
    %v529 = vpop.f32.mrb[0].mxu0
    %v530 = vadd.f32 0.0, %v529
    %v531 = vpop.f32.mrb[0].mxu0
    %532 = vmatprep.mubr.f32.mxu0 0.0
    %533 = vmatmul.mubr.f32.gmra.mrb[0].mxu0 %v395
    %v534 = vpop.f32.mrb[0].mxu0
    %v535 = vadd.f32 0.0, %v534
    %v536 = vpop.f32.mrb[0].mxu0
    %537 = vmatprep.mubr.f32.mxu0 0.0
    %538 = vmatmul.mubr.f32.gmra.mrb[0].mxu0 %v396
    %v539 = vpop.f32.mrb[0].mxu0
    %v540 = vadd.f32 0.0, %v539
    %v541 = vpop.f32.mrb[0].mxu0
    %542 = vmatprep.mubr.f32.mxu0 0.0
    %543 = vmatmul.mubr.f32.gmra.mrb[0].mxu0 %v397
    %v544 = vpop.f32.mrb[0].mxu0
    %v545 = vadd.f32 0.0, %v544
    %v546 = vpop.f32.mrb[0].mxu0
    %547 = vmatprep.mubr.f32.mxu0 0.0
    %548 = vmatmul.mubr.f32.gmra.mrb[0].mxu0 %v398
    %v549 = vpop.f32.mrb[0].mxu0
    %v550 = vadd.f32 0.0, %v549
    %v551 = vpop.f32.mrb[0].mxu0
    %552 = vmatprep.mubr.f32.mxu0 0.0
    %553 = vmatmul.mubr.f32.gmra.mrb[0].mxu0 %v399
    %v554 = vpop.f32.mrb[0].mxu0
    %v555 = vadd.f32 0.0, %v554
    %v556 = vpop.f32.mrb[0].mxu0
    %557 = vmatprep.mubr.f32.mxu0 0.0
    %558 = vmatmul.mubr.f32.gmra.mrb[0].mxu0 %v400
    %v559 = vpop.f32.mrb[0].mxu0
    %v560 = vadd.f32 0.0, %v559
    %v561 = vpop.f32.mrb[0].mxu0
    %562 = vdwg.mxu0
    %v563 = vpack.c.bf16 %v490, %v485
    %v564 = vpack.c.bf16 %v500, %v495
    %v565 = vpack.c.bf16 %v510, %v505
    %v566 = vpack.c.bf16 %v520, %v515
    %v567 = vpack.c.bf16 %v530, %v525
    %v568 = vpack.c.bf16 %v540, %v535
    %v569 = vpack.c.bf16 %v550, %v545
    %v570 = vpack.c.bf16 %v560, %v555
    %s571 = scalar_lea.vmem %s3, 1
    %v572 = vld [vmem:[%s571] sm:$0x1]
    %v574 = vlaneseq
    %v575 = vshrl.u32 %v574, 7
    %v576 = vsub.s32 0, %v575
    %v577 = vrot.slane %v572, %v576
    %579 = vmatprep.subr.bf16.mxu0 0
    %580 = vmatpush1.bf16.msra.mxu0 %v563
    %581 = vmatprep.subr.bf16.mxu0 0
    %582 = vmatpush1.bf16.msra.mxu0 %v564
    %583 = vmatprep.subr.bf16.mxu0 0
    %584 = vmatpush1.bf16.msra.mxu0 %v565
    %585 = vmatprep.subr.bf16.mxu0 0
    %586 = vmatpush1.bf16.msra.mxu0 %v566
    %587 = vmatprep.subr.bf16.mxu0 0
    %588 = vmatpush1.bf16.msra.mxu0 %v567
    %589 = vmatprep.subr.bf16.mxu0 0
    %590 = vmatpush1.bf16.msra.mxu0 %v568
    %591 = vmatprep.subr.bf16.mxu0 0
    %592 = vmatpush1.bf16.msra.mxu0 %v569
    %593 = vmatprep.subr.bf16.mxu0 0
    %594 = vmatpush1.bf16.msra.mxu0 %v570
    %595 = vmatprep.subr.bf16.mxu0 0
    %596 = vmatpush1.bf16.msra.mxu0 0
    %597 = vmatprep.subr.bf16.mxu0 0
    %598 = vmatpush1.bf16.msra.mxu0 0
    %599 = vmatprep.subr.bf16.mxu0 0
    %600 = vmatpush1.bf16.msra.mxu0 0
    %601 = vmatprep.subr.bf16.mxu0 0
    %602 = vmatpush1.bf16.msra.mxu0 0
    %603 = vmatprep.subr.bf16.mxu0 0
    %604 = vmatpush1.bf16.msra.mxu0 0
    %605 = vmatprep.subr.bf16.mxu0 0
    %606 = vmatpush1.bf16.msra.mxu0 0
    %607 = vmatprep.subr.bf16.mxu0 0
    %608 = vmatpush1.bf16.msra.mxu0 0
    %609 = vmatprep.subr.bf16.mxu0 0
    %610 = vmatpush1.bf16.msra.mxu0 0
    %611 = vmatprep.mubr.bf16.mxu0 0
    %612 = vmatmul.mubr.bf16.gmra.mrb[0].mxu0 %v272
    %v613 = vpop.f32.mrb[0].mxu0
    %v614 = vadd.f32 %v577, %v613
    %v615 = vpop.f32.mrb[0].mxu0
    %v616 = vpop.f32.mrb[0].mxu0
    %v617 = vadd.f32 %v577, %v616
    %v618 = vpop.f32.mrb[0].mxu0
    %619 = vmatprep.mubr.bf16.mxu0 0
    %620 = vmatmul.mubr.bf16.gmra.mrb[0].mxu0 %v273
    %v621 = vpop.f32.mrb[0].mxu0
    %v622 = vadd.f32 %v577, %v621
    %v623 = vpop.f32.mrb[0].mxu0
    %v624 = vpop.f32.mrb[0].mxu0
    %v625 = vadd.f32 %v577, %v624
    %v626 = vpop.f32.mrb[0].mxu0
    %627 = vmatprep.mubr.bf16.mxu0 0
    %628 = vmatmul.mubr.bf16.gmra.mrb[0].mxu0 %v274
    %v629 = vpop.f32.mrb[0].mxu0
    %v630 = vadd.f32 %v577, %v629
    %v631 = vpop.f32.mrb[0].mxu0
    %v632 = vpop.f32.mrb[0].mxu0
    %v633 = vadd.f32 %v577, %v632
    %v634 = vpop.f32.mrb[0].mxu0
    %635 = vmatprep.mubr.bf16.mxu0 0
    %636 = vmatmul.mubr.bf16.gmra.mrb[0].mxu0 %v275
    %v637 = vpop.f32.mrb[0].mxu0
    %v638 = vadd.f32 %v577, %v637
    %v639 = vpop.f32.mrb[0].mxu0
    %v640 = vpop.f32.mrb[0].mxu0
    %v641 = vadd.f32 %v577, %v640
    %v642 = vpop.f32.mrb[0].mxu0
    %643 = vmatprep.mubr.bf16.mxu0 0
    %644 = vmatmul.mubr.bf16.gmra.mrb[0].mxu0 %v276
    %v645 = vpop.f32.mrb[0].mxu0
    %v646 = vadd.f32 %v577, %v645
    %v647 = vpop.f32.mrb[0].mxu0
    %v648 = vpop.f32.mrb[0].mxu0
    %v649 = vadd.f32 %v577, %v648
    %v650 = vpop.f32.mrb[0].mxu0
    %651 = vmatprep.mubr.bf16.mxu0 0
    %652 = vmatmul.mubr.bf16.gmra.mrb[0].mxu0 %v277
    %v653 = vpop.f32.mrb[0].mxu0
    %v654 = vadd.f32 %v577, %v653
    %v655 = vpop.f32.mrb[0].mxu0
    %v656 = vpop.f32.mrb[0].mxu0
    %v657 = vadd.f32 %v577, %v656
    %v658 = vpop.f32.mrb[0].mxu0
    %659 = vmatprep.mubr.bf16.mxu0 0
    %660 = vmatmul.mubr.bf16.gmra.mrb[0].mxu0 %v278
    %v661 = vpop.f32.mrb[0].mxu0
    %v662 = vadd.f32 %v577, %v661
    %v663 = vpop.f32.mrb[0].mxu0
    %v664 = vpop.f32.mrb[0].mxu0
    %v665 = vadd.f32 %v577, %v664
    %v666 = vpop.f32.mrb[0].mxu0
    %667 = vmatprep.mubr.bf16.mxu0 0
    %668 = vmatmul.mubr.bf16.gmra.mrb[0].mxu0 %v279
    %v669 = vpop.f32.mrb[0].mxu0
    %v670 = vadd.f32 %v577, %v669
    %v671 = vpop.f32.mrb[0].mxu0
    %v672 = vpop.f32.mrb[0].mxu0
    %v673 = vadd.f32 %v577, %v672
    %v674 = vpop.f32.mrb[0].mxu0
    %675 = vdwg.mxu0
    %v676 = vmax.f32 %v614, 0.0
    %v677 = vmax.f32 %v617, 0.0
    %v678 = vmax.f32 %v622, 0.0
    %v679 = vmax.f32 %v625, 0.0
    %v680 = vmax.f32 %v630, 0.0
    %v681 = vmax.f32 %v633, 0.0
    %v682 = vmax.f32 %v638, 0.0
    %v683 = vmax.f32 %v641, 0.0
    %v684 = vmax.f32 %v646, 0.0
    %v685 = vmax.f32 %v649, 0.0
    %v686 = vmax.f32 %v654, 0.0
    %v687 = vmax.f32 %v657, 0.0
    %v688 = vmax.f32 %v662, 0.0
    %v689 = vmax.f32 %v665, 0.0
    %v690 = vmax.f32 %v670, 0.0
    %v691 = vmax.f32 %v673, 0.0
    %s692 = scalar_lea.vmem [#allocation2], 256
    %v693 = vld [vmem:[%s692] sm:$0xff]
    %v694 = vld [vmem:[%s692 + $0x8] sm:$0xff]
    %v695 = vld [vmem:[%s692 + $0x10] sm:$0xff]
    %v696 = vld [vmem:[%s692 + $0x18] sm:$0xff]
    %v697 = vld [vmem:[%s692 + $0x20] sm:$0xff]
    %v698 = vld [vmem:[%s692 + $0x28] sm:$0xff]
    %v699 = vld [vmem:[%s692 + $0x30] sm:$0xff]
    %v700 = vld [vmem:[%s692 + $0x38] sm:$0xff]
    %v701 = vld [vmem:[%s692 + $0x40] sm:$0xff]
    %v702 = vld [vmem:[%s692 + $0x48] sm:$0xff]
    %v703 = vld [vmem:[%s692 + $0x50] sm:$0xff]
    %v704 = vld [vmem:[%s692 + $0x58] sm:$0xff]
    %v705 = vld [vmem:[%s692 + $0x60] sm:$0xff]
    %v706 = vld [vmem:[%s692 + $0x68] sm:$0xff]
    %v707 = vld [vmem:[%s692 + $0x70] sm:$0xff]
    %v708 = vld [vmem:[%s692 + $0x78] sm:$0xff]
    %709 = vmatprep.subr.mxu0 0.0
    %710 = vmatpush1.msra.mxu0 %v693
    %711 = vmatprep.subr.mxu0 0.0
    %712 = vmatpush1.msra.mxu0 %v694
    %713 = vmatprep.subr.mxu0 0.0
    %714 = vmatpush1.msra.mxu0 %v695
    %715 = vmatprep.subr.mxu0 0.0
    %716 = vmatpush1.msra.mxu0 %v696
    %717 = vmatprep.subr.mxu0 0.0
    %718 = vmatpush1.msra.mxu0 %v697
    %719 = vmatprep.subr.mxu0 0.0
    %720 = vmatpush1.msra.mxu0 %v698
    %721 = vmatprep.subr.mxu0 0.0
    %722 = vmatpush1.msra.mxu0 %v699
    %723 = vmatprep.subr.mxu0 0.0
    %724 = vmatpush1.msra.mxu0 %v700
    %725 = vmatprep.subr.mxu0 0.0
    %726 = vmatpush1.msra.mxu0 %v701
    %727 = vmatprep.subr.mxu0 0.0
    %728 = vmatpush1.msra.mxu0 %v702
    %729 = vmatprep.subr.mxu0 0.0
    %730 = vmatpush1.msra.mxu0 %v703
    %731 = vmatprep.subr.mxu0 0.0
    %732 = vmatpush1.msra.mxu0 %v704
    %733 = vmatprep.subr.mxu0 0.0
    %734 = vmatpush1.msra.mxu0 %v705
    %735 = vmatprep.subr.mxu0 0.0
    %736 = vmatpush1.msra.mxu0 %v706
    %737 = vmatprep.subr.mxu0 0.0
    %738 = vmatpush1.msra.mxu0 %v707
    %739 = vmatprep.subr.mxu0 0.0
    %740 = vmatpush1.msra.mxu0 %v708
    %741 = vmatprep.subr.mxu0 0.0
    %742 = vmatpush1.msra.mxu0 0.0
    %743 = vmatprep.subr.mxu0 0.0
    %744 = vmatpush1.msra.mxu0 0.0
    %745 = vmatprep.subr.mxu0 0.0
    %746 = vmatpush1.msra.mxu0 0.0
    %747 = vmatprep.subr.mxu0 0.0
    %748 = vmatpush1.msra.mxu0 0.0
    %749 = vmatprep.subr.mxu0 0.0
    %750 = vmatpush1.msra.mxu0 0.0
    %751 = vmatprep.subr.mxu0 0.0
    %752 = vmatpush1.msra.mxu0 0.0
    %753 = vmatprep.subr.mxu0 0.0
    %754 = vmatpush1.msra.mxu0 0.0
    %755 = vmatprep.subr.mxu0 0.0
    %756 = vmatpush1.msra.mxu0 0.0
    %757 = vmatprep.subr.mxu0 0.0
    %758 = vmatpush1.msra.mxu0 0.0
    %759 = vmatprep.subr.mxu0 0.0
    %760 = vmatpush1.msra.mxu0 0.0
    %761 = vmatprep.subr.mxu0 0.0
    %762 = vmatpush1.msra.mxu0 0.0
    %763 = vmatprep.subr.mxu0 0.0
    %764 = vmatpush1.msra.mxu0 0.0
    %765 = vmatprep.subr.mxu0 0.0
    %766 = vmatpush1.msra.mxu0 0.0
    %767 = vmatprep.subr.mxu0 0.0
    %768 = vmatpush1.msra.mxu0 0.0
    %769 = vmatprep.subr.mxu0 0.0
    %770 = vmatpush1.msra.mxu0 0.0
    %771 = vmatprep.subr.mxu0 0.0
    %772 = vmatpush1.msra.mxu0 0.0
    %773 = vmatprep.mubr.f32.mxu0 0.0
    %774 = vmatmul.mubr.f32.gmra.mrb[0].mxu0 %v676
    %v775 = vpop.f32.mrb[0].mxu0
    %v776 = vadd.f32 0.0, %v775
    %v777 = vpop.f32.mrb[0].mxu0
    %778 = vmatprep.mubr.f32.mxu0 0.0
    %779 = vmatmul.mubr.f32.gmra.mrb[0].mxu0 %v677
    %v780 = vpop.f32.mrb[0].mxu0
    %v781 = vadd.f32 0.0, %v780
    %v782 = vpop.f32.mrb[0].mxu0
    %783 = vmatprep.mubr.f32.mxu0 0.0
    %784 = vmatmul.mubr.f32.gmra.mrb[0].mxu0 %v678
    %v785 = vpop.f32.mrb[0].mxu0
    %v786 = vadd.f32 0.0, %v785
    %v787 = vpop.f32.mrb[0].mxu0
    %788 = vmatprep.mubr.f32.mxu0 0.0
    %789 = vmatmul.mubr.f32.gmra.mrb[0].mxu0 %v679
    %v790 = vpop.f32.mrb[0].mxu0
    %v791 = vadd.f32 0.0, %v790
    %v792 = vpop.f32.mrb[0].mxu0
    %793 = vmatprep.mubr.f32.mxu0 0.0
    %794 = vmatmul.mubr.f32.gmra.mrb[0].mxu0 %v680
    %v795 = vpop.f32.mrb[0].mxu0
    %v796 = vadd.f32 0.0, %v795
    %v797 = vpop.f32.mrb[0].mxu0
    %798 = vmatprep.mubr.f32.mxu0 0.0
    %799 = vmatmul.mubr.f32.gmra.mrb[0].mxu0 %v681
    %v800 = vpop.f32.mrb[0].mxu0
    %v801 = vadd.f32 0.0, %v800
    %v802 = vpop.f32.mrb[0].mxu0
    %803 = vmatprep.mubr.f32.mxu0 0.0
    %804 = vmatmul.mubr.f32.gmra.mrb[0].mxu0 %v682
    %v805 = vpop.f32.mrb[0].mxu0
    %v806 = vadd.f32 0.0, %v805
    %v807 = vpop.f32.mrb[0].mxu0
    %808 = vmatprep.mubr.f32.mxu0 0.0
    %809 = vmatmul.mubr.f32.gmra.mrb[0].mxu0 %v683
    %v810 = vpop.f32.mrb[0].mxu0
    %v811 = vadd.f32 0.0, %v810
    %v812 = vpop.f32.mrb[0].mxu0
    %813 = vmatprep.mubr.f32.mxu0 0.0
    %814 = vmatmul.mubr.f32.gmra.mrb[0].mxu0 %v684
    %v815 = vpop.f32.mrb[0].mxu0
    %v816 = vadd.f32 0.0, %v815
    %v817 = vpop.f32.mrb[0].mxu0
    %818 = vmatprep.mubr.f32.mxu0 0.0
    %819 = vmatmul.mubr.f32.gmra.mrb[0].mxu0 %v685
    %v820 = vpop.f32.mrb[0].mxu0
    %v821 = vadd.f32 0.0, %v820
    %v822 = vpop.f32.mrb[0].mxu0
    %823 = vmatprep.mubr.f32.mxu0 0.0
    %824 = vmatmul.mubr.f32.gmra.mrb[0].mxu0 %v686
    %v825 = vpop.f32.mrb[0].mxu0
    %v826 = vadd.f32 0.0, %v825
    %v827 = vpop.f32.mrb[0].mxu0
    %828 = vmatprep.mubr.f32.mxu0 0.0
    %829 = vmatmul.mubr.f32.gmra.mrb[0].mxu0 %v687
    %v830 = vpop.f32.mrb[0].mxu0
    %v831 = vadd.f32 0.0, %v830
    %v832 = vpop.f32.mrb[0].mxu0
    %833 = vmatprep.mubr.f32.mxu0 0.0
    %834 = vmatmul.mubr.f32.gmra.mrb[0].mxu0 %v688
    %v835 = vpop.f32.mrb[0].mxu0
    %v836 = vadd.f32 0.0, %v835
    %v837 = vpop.f32.mrb[0].mxu0
    %838 = vmatprep.mubr.f32.mxu0 0.0
    %839 = vmatmul.mubr.f32.gmra.mrb[0].mxu0 %v689
    %v840 = vpop.f32.mrb[0].mxu0
    %v841 = vadd.f32 0.0, %v840
    %v842 = vpop.f32.mrb[0].mxu0
    %843 = vmatprep.mubr.f32.mxu0 0.0
    %844 = vmatmul.mubr.f32.gmra.mrb[0].mxu0 %v690
    %v845 = vpop.f32.mrb[0].mxu0
    %v846 = vadd.f32 0.0, %v845
    %v847 = vpop.f32.mrb[0].mxu0
    %848 = vmatprep.mubr.f32.mxu0 0.0
    %849 = vmatmul.mubr.f32.gmra.mrb[0].mxu0 %v691
    %v850 = vpop.f32.mrb[0].mxu0
    %v851 = vadd.f32 0.0, %v850
    %v852 = vpop.f32.mrb[0].mxu0
    %853 = vdwg.mxu0
    %v854 = vpack.c.bf16 %v781, %v776
    %v855 = vpack.c.bf16 %v791, %v786
    %v856 = vpack.c.bf16 %v801, %v796
    %v857 = vpack.c.bf16 %v811, %v806
    %v858 = vpack.c.bf16 %v821, %v816
    %v859 = vpack.c.bf16 %v831, %v826
    %v860 = vpack.c.bf16 %v841, %v836
    %v861 = vpack.c.bf16 %v851, %v846
    %s862 = scalar_lea.vmem %s3, 2
    %v863 = vld [vmem:[%s862] sm:$0x1]
    %v865 = vlaneseq
    %v866 = vshrl.u32 %v865, 7
    %v867 = vsub.s32 0, %v866
    %v868 = vrot.slane %v863, %v867
    %870 = vmatprep.subr.bf16.mxu0 0
    %871 = vmatpush1.bf16.msra.mxu0 %v854
    %872 = vmatprep.subr.bf16.mxu0 0
    %873 = vmatpush1.bf16.msra.mxu0 %v855
    %874 = vmatprep.subr.bf16.mxu0 0
    %875 = vmatpush1.bf16.msra.mxu0 %v856
    %876 = vmatprep.subr.bf16.mxu0 0
    %877 = vmatpush1.bf16.msra.mxu0 %v857
    %878 = vmatprep.subr.bf16.mxu0 0
    %879 = vmatpush1.bf16.msra.mxu0 %v858
    %880 = vmatprep.subr.bf16.mxu0 0
    %881 = vmatpush1.bf16.msra.mxu0 %v859
    %882 = vmatprep.subr.bf16.mxu0 0
    %883 = vmatpush1.bf16.msra.mxu0 %v860
    %884 = vmatprep.subr.bf16.mxu0 0
    %885 = vmatpush1.bf16.msra.mxu0 %v861
    %886 = vmatprep.subr.bf16.mxu0 0
    %887 = vmatpush1.bf16.msra.mxu0 0
    %888 = vmatprep.subr.bf16.mxu0 0
    %889 = vmatpush1.bf16.msra.mxu0 0
    %890 = vmatprep.subr.bf16.mxu0 0
    %891 = vmatpush1.bf16.msra.mxu0 0
    %892 = vmatprep.subr.bf16.mxu0 0
    %893 = vmatpush1.bf16.msra.mxu0 0
    %894 = vmatprep.subr.bf16.mxu0 0
    %895 = vmatpush1.bf16.msra.mxu0 0
    %896 = vmatprep.subr.bf16.mxu0 0
    %897 = vmatpush1.bf16.msra.mxu0 0
    %898 = vmatprep.subr.bf16.mxu0 0
    %899 = vmatpush1.bf16.msra.mxu0 0
    %900 = vmatprep.subr.bf16.mxu0 0
    %901 = vmatpush1.bf16.msra.mxu0 0
    %902 = vmatprep.mubr.bf16.mxu0 0
    %903 = vmatmul.mubr.bf16.gmra.mrb[0].mxu0 %v272
    %v904 = vpop.f32.mrb[0].mxu0
    %v905 = vadd.f32 %v868, %v904
    %v906 = vpop.f32.mrb[0].mxu0
    %v907 = vpop.f32.mrb[0].mxu0
    %v908 = vadd.f32 %v868, %v907
    %v909 = vpop.f32.mrb[0].mxu0
    %910 = vmatprep.mubr.bf16.mxu0 0
    %911 = vmatmul.mubr.bf16.gmra.mrb[0].mxu0 %v273
    %v912 = vpop.f32.mrb[0].mxu0
    %v913 = vadd.f32 %v868, %v912
    %v914 = vpop.f32.mrb[0].mxu0
    %v915 = vpop.f32.mrb[0].mxu0
    %v916 = vadd.f32 %v868, %v915
    %v917 = vpop.f32.mrb[0].mxu0
    %918 = vmatprep.mubr.bf16.mxu0 0
    %919 = vmatmul.mubr.bf16.gmra.mrb[0].mxu0 %v274
    %v920 = vpop.f32.mrb[0].mxu0
    %v921 = vadd.f32 %v868, %v920
    %v922 = vpop.f32.mrb[0].mxu0
    %v923 = vpop.f32.mrb[0].mxu0
    %v924 = vadd.f32 %v868, %v923
    %v925 = vpop.f32.mrb[0].mxu0
    %926 = vmatprep.mubr.bf16.mxu0 0
    %927 = vmatmul.mubr.bf16.gmra.mrb[0].mxu0 %v275
    %v928 = vpop.f32.mrb[0].mxu0
    %v929 = vadd.f32 %v868, %v928
    %v930 = vpop.f32.mrb[0].mxu0
    %v931 = vpop.f32.mrb[0].mxu0
    %v932 = vadd.f32 %v868, %v931
    %v933 = vpop.f32.mrb[0].mxu0
    %934 = vmatprep.mubr.bf16.mxu0 0
    %935 = vmatmul.mubr.bf16.gmra.mrb[0].mxu0 %v276
    %v936 = vpop.f32.mrb[0].mxu0
    %v937 = vadd.f32 %v868, %v936
    %v938 = vpop.f32.mrb[0].mxu0
    %v939 = vpop.f32.mrb[0].mxu0
    %v940 = vadd.f32 %v868, %v939
    %v941 = vpop.f32.mrb[0].mxu0
    %942 = vmatprep.mubr.bf16.mxu0 0
    %943 = vmatmul.mubr.bf16.gmra.mrb[0].mxu0 %v277
    %v944 = vpop.f32.mrb[0].mxu0
    %v945 = vadd.f32 %v868, %v944
    %v946 = vpop.f32.mrb[0].mxu0
    %v947 = vpop.f32.mrb[0].mxu0
    %v948 = vadd.f32 %v868, %v947
    %v949 = vpop.f32.mrb[0].mxu0
    %950 = vmatprep.mubr.bf16.mxu0 0
    %951 = vmatmul.mubr.bf16.gmra.mrb[0].mxu0 %v278
    %v952 = vpop.f32.mrb[0].mxu0
    %v953 = vadd.f32 %v868, %v952
    %v954 = vpop.f32.mrb[0].mxu0
    %v955 = vpop.f32.mrb[0].mxu0
    %v956 = vadd.f32 %v868, %v955
    %v957 = vpop.f32.mrb[0].mxu0
    %958 = vmatprep.mubr.bf16.mxu0 0
    %959 = vmatmul.mubr.bf16.gmra.mrb[0].mxu0 %v279
    %v960 = vpop.f32.mrb[0].mxu0
    %v961 = vadd.f32 %v868, %v960
    %v962 = vpop.f32.mrb[0].mxu0
    %v963 = vpop.f32.mrb[0].mxu0
    %v964 = vadd.f32 %v868, %v963
    %v965 = vpop.f32.mrb[0].mxu0
    %966 = vdwg.mxu0
    %967 = vst [vmem:[%s4] sm:$0xff] %v905
    %968 = vst [vmem:[%s4 + $0x8] sm:$0xff] %v908
    %969 = vst [vmem:[%s4 + $0x10] sm:$0xff] %v913
    %970 = vst [vmem:[%s4 + $0x18] sm:$0xff] %v916
    %971 = vst [vmem:[%s4 + $0x20] sm:$0xff] %v921
    %972 = vst [vmem:[%s4 + $0x28] sm:$0xff] %v924
    %973 = vst [vmem:[%s4 + $0x30] sm:$0xff] %v929
    %974 = vst [vmem:[%s4 + $0x38] sm:$0xff] %v932
    %975 = vst [vmem:[%s4 + $0x40] sm:$0xff] %v937
    %976 = vst [vmem:[%s4 + $0x48] sm:$0xff] %v940
    %977 = vst [vmem:[%s4 + $0x50] sm:$0xff] %v945
    %978 = vst [vmem:[%s4 + $0x58] sm:$0xff] %v948
    %979 = vst [vmem:[%s4 + $0x60] sm:$0xff] %v953
    %980 = vst [vmem:[%s4 + $0x68] sm:$0xff] %v956
    %981 = vst [vmem:[%s4 + $0x70] sm:$0xff] %v961
    %982 = vst [vmem:[%s4 + $0x78] sm:$0xff] %v964
    // Predicated region
    $region22: #{gcn_forward.1} parent=1 // pred_check
      _
    $region23: #{gcn_forward.1} parent=1 // pred_check_branch
      %984 = sbr.rel (0) target = $region25
    $region24: #{gcn_forward.1} parent=1 // pred_region
      _
    $region25: #{gcn_forward.1} parent=1 // pred_fallthru
      _
    // Predicated region
    $region26: #{gcn_forward.1} parent=1 // pred_check
      _
    $region27: #{gcn_forward.1} parent=1 // pred_check_branch
      %986 = sbr.rel (0) target = $region29
    $region28: #{gcn_forward.1} parent=1 // pred_region
      _
    $region29: #{gcn_forward.1} parent=1 // pred_fallthru
      _
    %987 = vsyncpa [#allocation3], 1

</llo_original>
